<compile_context>
chip_gen: v6e
topology: v6e:2x2x1
jax: 0.10.0
libtpu: 0.0.40
codegen_flags: <defaults>
</compile_context>

<pallas_src>
import functools

import jax
import jax.numpy as jnp
import numpy as np
from jax.experimental import pallas as pl
from jax.experimental.pallas import tpu as pltpu


def _choose_rows_per_step(gh: int, w: int, target_rows: int) -> int:
    """Number of (flattened B*H) image rows handled per grid step.

    Constraints: divides gh (no input padding), n_h*W % 8 == 0 (sublane tile)
    unless n_h == gh (full-array block is always legal). Prefers at most
    `target_rows` input pixels per step and a grid of >= 2 steps (v7x
    megacore)."""
    valid = [k for k in range(1, gh + 1)
             if gh % k == 0 and ((k * w) % 8 == 0 or k == gh)]
    prefer = [k for k in valid if k * w <= target_rows and gh // k >= 2]
    if prefer:
        return max(prefer)
    small = [k for k in valid if k * w <= target_rows]
    if small:
        return max(small)
    return min(valid)


def _expand_rearrange_norm_kernel(x_ref, wt_ref, p_ref, q_ref, g_ref, b_ref,
                                  o_ref, *, n_h, width, cols, p1, eps):
    # x_ref : (TM, C)   TM = n_h * width input pixels (rows of x)
    # wt_ref: (C, E)    transposed Linear weight, E = p1*p2*Cout (resident)
    # p_ref : (E, G)    block-diagonal 1/Cout pooling matrix, G = p1*p2
    # q_ref : (G, E)    block-diagonal 1s broadcast matrix
    # g_ref : (1, E)    LayerNorm gamma tiled to length E
    # b_ref : (1, E)    LayerNorm beta tiled to length E
    # o_ref : (n_h, p1, width, cols)  cols = p2*Cout = C

    # Expand: one dense MXU matmul per tile, f32 accumulation.
    y = jnp.dot(x_ref[...], wt_ref[...],
                preferred_element_type=jnp.float32)              # (TM, E)

    # Group statistics via tiny pooling matmuls -> stays off the masked
    # lane-sub-slice / XLU-reduction path. Two-pass mean/var, all f32.
    mu_g = jnp.dot(y, p_ref[...],
                   preferred_element_type=jnp.float32)           # (TM, G)
    mu = jnp.dot(mu_g, q_ref[...],
                 preferred_element_type=jnp.float32)             # (TM, E)
    yc = y - mu
    var_g = jnp.dot(yc * yc, p_ref[...],
                    preferred_element_type=jnp.float32)          # (TM, G)
    inv_g = jax.lax.rsqrt(var_g + eps)
    inv = jnp.dot(inv_g, q_ref[...],
                  preferred_element_type=jnp.float32)            # (TM, E)
    yn = yc * inv * g_ref[...] + b_ref[...]                      # (TM, E) f32

    # Fused rearrange: '(h w), (p1 p2 c)' -> '(h), p1, (w), (p2 c)'.
    # Static p1 loop; each iteration is one full-minor (n_h, width, cols)
    # store into the output tile, written exactly once (no scratch).
    for j in range(p1):
        blk = yn[:, j * cols:(j + 1) * cols].reshape(n_h, width, cols)
        o_ref[:, j, :, :] = blk.astype(o_ref.dtype)


def final_patch_expand2d(x, w_expand, gamma, beta, *, dim_scale=4, eps=1e-5,
                         block_rows=1024, io_dtype=jnp.bfloat16):
    """x: (B, H, W, C); w_expand: (dim_scale*C, C) [nn.Linear weight, no bias];
    gamma/beta: (C // dim_scale,). Returns (B, dim_scale*H, dim_scale*W,
    C // dim_scale) in `io_dtype`."""
    B, H, W, C = x.shape
    p1 = dim_scale
    assert C % dim_scale == 0, "C must be divisible by dim_scale"
    Cout = C // dim_scale
    E = dim_scale * C                      # = p1 * p2 * Cout
    G = dim_scale * dim_scale
    cols = dim_scale * Cout                # = p2 * Cout = C
    assert w_expand.shape == (E, C)

    if W % 8 != 0:
        # TODO(synk): add an unfused fallback (dense (M,E) output + XLA
        # rearrange) for widths that are not a multiple of 8.
        raise NotImplementedError("fused-rearrange kernel requires W % 8 == 0")

    GH = B * H
    M = GH * W
    n_h = _choose_rows_per_step(GH, W, block_rows)
    TM = n_h * W
    grid = (GH // n_h,)

    # Inputs: bf16 (default) or f32 streaming; stats/params stay f32.
    x2 = x.reshape(M, C).astype(io_dtype)
    wt = jnp.transpose(w_expand).astype(io_dtype)                # (C, E)

    gids = np.arange(E) // Cout
    pool = (gids[:, None] == np.arange(G)[None, :]).astype(np.float32) / Cout
    bcast = (np.arange(G)[:, None] == gids[None, :]).astype(np.float32)
    p_mat = jnp.asarray(pool)                                    # (E, G)
    q_mat = jnp.asarray(bcast)                                   # (G, E)
    g_e = jnp.tile(gamma.astype(jnp.float32), G).reshape(1, E)
    b_e = jnp.tile(beta.astype(jnp.float32), G).reshape(1, E)

    kernel = functools.partial(_expand_rearrange_norm_kernel,
                               n_h=n_h, width=W, cols=cols, p1=p1, eps=eps)

    out = pl.pallas_call(
        kernel,
        out_shape=jax.ShapeDtypeStruct((GH, p1, W, cols), io_dtype),
        grid_spec=pltpu.PrefetchScalarGridSpec(
            num_scalar_prefetch=0,
            grid=grid,
            in_specs=[
                pl.BlockSpec((TM, C), lambda i: (i, 0)),      # x rows (tiled)
                pl.BlockSpec((C, E), lambda i: (0, 0)),       # weight (resident)
                pl.BlockSpec((E, G), lambda i: (0, 0)),       # pooling P (resident)
                pl.BlockSpec((G, E), lambda i: (0, 0)),       # broadcast Q (resident)
                pl.BlockSpec((1, E), lambda i: (0, 0)),       # gamma tiled (resident)
                pl.BlockSpec((1, E), lambda i: (0, 0)),       # beta tiled (resident)
            ],
            out_specs=pl.BlockSpec((n_h, p1, W, cols),
                                   lambda i: (i, 0, 0, 0)),
        ),
        compiler_params=pltpu.CompilerParams(
            dimension_semantics=("parallel",),                # megacore on v7x
            vmem_limit_bytes=32 * 1024 * 1024,
        ),
    )(x2, wt, p_mat, q_mat, g_e, b_e)

    # Rows are already ordered (b, h, p1, w, p2, c) -> copy-free reshape.
    return out.reshape(B, H * dim_scale, W * dim_scale, Cout)


def final_patch_expand2d_reference(x, w_expand, gamma, beta, *, dim_scale=4,
                                   eps=1e-5):
    """Pure-JAX reference matching the PyTorch module."""
    B, H, W, C = x.shape
    Cout = C // dim_scale
    y = jnp.einsum("bhwc,ec->bhwe", x, w_expand)                 # Linear, no bias
    y = y.reshape(B, H, W, dim_scale, dim_scale, Cout)
    y = jnp.transpose(y, (0, 1, 3, 2, 4, 5)).reshape(
        B, H * dim_scale, W * dim_scale, Cout)
    mu = jnp.mean(y, axis=-1, keepdims=True)
    var = jnp.mean((y - mu) ** 2, axis=-1, keepdims=True)
    return (y - mu) * jax.lax.rsqrt(var + eps) * gamma + beta


if __name__ == "__main__":
    # Small deterministic setup: B=2, H=W=8, dim=C=16, dim_scale=4 -> Cout=4.
    B, H, W, C = 2, 8, 8, 16
    dim_scale = 4
    Cout = C // dim_scale
    E = dim_scale * C

    key = jax.random.PRNGKey(0)
    kx, kw, kg, kb = jax.random.split(key, 4)
    x = jax.random.normal(kx, (B, H, W, C), dtype=jnp.float32)
    # nn.Linear(dim, dim_scale*dim, bias=False).weight: (E, C)
    w = 0.1 * jax.random.normal(kw, (E, C), dtype=jnp.float32)
    gamma = 1.0 + 0.1 * jax.random.normal(kg, (Cout,), dtype=jnp.float32)
    beta = 0.1 * jax.random.normal(kb, (Cout,), dtype=jnp.float32)

    ref = final_patch_expand2d_reference(x, w, gamma, beta, dim_scale=dim_scale)

    # 1) f32 I/O path: exact module semantics. B*H=16, n_h=8 -> grid=(2,),
    #    exercising the pipelined, megacore-splittable grid.
    out_f32 = final_patch_expand2d(x, w, gamma, beta, dim_scale=dim_scale,
                                   block_rows=64, io_dtype=jnp.float32)
    out_f32 = jax.block_until_ready(out_f32)
    assert out_f32.shape == (B, H * dim_scale, W * dim_scale, Cout)
    np.testing.assert_allclose(np.asarray(out_f32), np.asarray(ref),
                               rtol=2e-4, atol=5e-4)

    # 2) bf16-streaming path (default, bandwidth-optimized). Compare against
    #    the same math on bf16-quantized inputs; the final bf16 output cast
    #    dominates the tolerance.
    out_bf16 = final_patch_expand2d(x, w, gamma, beta, dim_scale=dim_scale,
                                    block_rows=64)
    out_bf16 = jax.block_until_ready(out_bf16)
    assert out_bf16.shape == (B, H * dim_scale, W * dim_scale, Cout)
    xq = x.astype(jnp.bfloat16).astype(jnp.float32)
    wq = w.astype(jnp.bfloat16).astype(jnp.float32)
    ref_q = final_patch_expand2d_reference(xq, wq, gamma, beta,
                                           dim_scale=dim_scale)
    np.testing.assert_allclose(np.asarray(out_bf16.astype(jnp.float32)),
                               np.asarray(ref_q), rtol=2e-2, atol=2e-2)

    print("KERNEL_OK")
</pallas_src>

<mosaic_0001>
module attributes {stable_mosaic.version = 11 : i64} {
  func.func @_expand_rearrange_norm_kernel(%arg0: i32, %arg1: memref<64x16xf32, #tpu.memory_space<vmem>>, %arg2: memref<16x64xf32, #tpu.memory_space<vmem>>, %arg3: memref<64x16xf32, #tpu.memory_space<vmem>>, %arg4: memref<16x64xf32, #tpu.memory_space<vmem>>, %arg5: memref<1x64xf32, #tpu.memory_space<vmem>>, %arg6: memref<1x64xf32, #tpu.memory_space<vmem>>, %arg7: memref<8x4x8x16xf32, #tpu.memory_space<vmem>>) attributes {dimension_semantics = [#tpu.dimension_semantics<parallel>], iteration_bounds = array<i64: 2>, scalar_prefetch = 0 : i64, scratch_operands = 0 : i64, tpu.core_type = #tpu.core_type<tc>, window_params = [{transform_indices = @transform_0, window_bounds = array<i64: 64, 16>}, {pipeline_mode = #tpu.pipeline_mode<synchronous>, transform_indices = @transform_1, window_bounds = array<i64: 16, 64>}, {pipeline_mode = #tpu.pipeline_mode<synchronous>, transform_indices = @transform_2, window_bounds = array<i64: 64, 16>}, {pipeline_mode = #tpu.pipeline_mode<synchronous>, transform_indices = @transform_3, window_bounds = array<i64: 16, 64>}, {pipeline_mode = #tpu.pipeline_mode<synchronous>, transform_indices = @transform_4, window_bounds = array<i64: 1, 64>}, {pipeline_mode = #tpu.pipeline_mode<synchronous>, transform_indices = @transform_5, window_bounds = array<i64: 1, 64>}, {transform_indices = @transform_6, window_bounds = array<i64: 8, 4, 8, 16>}]} {
    %c0 = arith.constant 0 : index
    %c0_0 = arith.constant 0 : index
    %0 = vector.load %arg1[%c0, %c0_0] : memref<64x16xf32, #tpu.memory_space<vmem>>, vector<64x16xf32>
    %c0_1 = arith.constant 0 : index
    %c0_2 = arith.constant 0 : index
    %1 = vector.load %arg2[%c0_1, %c0_2] : memref<16x64xf32, #tpu.memory_space<vmem>>, vector<16x64xf32>
    %cst = arith.constant dense<0.000000e+00> : vector<64x64xf32>
    %2 = tpu.matmul %0, %1, %cst {dimension_numbers = #tpu.dot_dimension_numbers<[1], [0], [0], [1], [0, 0, 1, 1], [], []>} : vector<64x16xf32>, vector<16x64xf32>, vector<64x64xf32> -> vector<64x64xf32>
    %c0_3 = arith.constant 0 : index
    %c0_4 = arith.constant 0 : index
    %3 = vector.load %arg3[%c0_3, %c0_4] : memref<64x16xf32, #tpu.memory_space<vmem>>, vector<64x16xf32>
    %cst_5 = arith.constant dense<0.000000e+00> : vector<64x16xf32>
    %4 = tpu.matmul %2, %3, %cst_5 {dimension_numbers = #tpu.dot_dimension_numbers<[1], [0], [0], [1], [0, 0, 1, 1], [], []>} : vector<64x64xf32>, vector<64x16xf32>, vector<64x16xf32> -> vector<64x16xf32>
    %c0_6 = arith.constant 0 : index
    %c0_7 = arith.constant 0 : index
    %5 = vector.load %arg4[%c0_6, %c0_7] : memref<16x64xf32, #tpu.memory_space<vmem>>, vector<16x64xf32>
    %cst_8 = arith.constant dense<0.000000e+00> : vector<64x64xf32>
    %6 = tpu.matmul %4, %5, %cst_8 {dimension_numbers = #tpu.dot_dimension_numbers<[1], [0], [0], [1], [0, 0, 1, 1], [], []>} : vector<64x16xf32>, vector<16x64xf32>, vector<64x64xf32> -> vector<64x64xf32>
    %7 = arith.subf %2, %6 : vector<64x64xf32>
    %8 = arith.mulf %7, %7 : vector<64x64xf32>
    %c0_9 = arith.constant 0 : index
    %c0_10 = arith.constant 0 : index
    %9 = vector.load %arg3[%c0_9, %c0_10] : memref<64x16xf32, #tpu.memory_space<vmem>>, vector<64x16xf32>
    %cst_11 = arith.constant dense<0.000000e+00> : vector<64x16xf32>
    %10 = tpu.matmul %8, %9, %cst_11 {dimension_numbers = #tpu.dot_dimension_numbers<[1], [0], [0], [1], [0, 0, 1, 1], [], []>} : vector<64x64xf32>, vector<64x16xf32>, vector<64x16xf32> -> vector<64x16xf32>
    %cst_12 = arith.constant 9.99999974E-6 : f32
    %11 = vector.broadcast %cst_12 : f32 to vector<64x16xf32>
    %12 = arith.addf %10, %11 : vector<64x16xf32>
    %13 = math.rsqrt %12 : vector<64x16xf32>
    %c0_13 = arith.constant 0 : index
    %c0_14 = arith.constant 0 : index
    %14 = vector.load %arg4[%c0_13, %c0_14] : memref<16x64xf32, #tpu.memory_space<vmem>>, vector<16x64xf32>
    %cst_15 = arith.constant dense<0.000000e+00> : vector<64x64xf32>
    %15 = tpu.matmul %13, %14, %cst_15 {dimension_numbers = #tpu.dot_dimension_numbers<[1], [0], [0], [1], [0, 0, 1, 1], [], []>} : vector<64x16xf32>, vector<16x64xf32>, vector<64x64xf32> -> vector<64x64xf32>
    %16 = arith.mulf %7, %15 : vector<64x64xf32>
    %c0_16 = arith.constant 0 : index
    %c0_17 = arith.constant 0 : index
    %17 = vector.load %arg5[%c0_16, %c0_17] : memref<1x64xf32, #tpu.memory_space<vmem>>, vector<1x64xf32>
    %18 = vector.broadcast %17 : vector<1x64xf32> to vector<64x64xf32>
    %19 = arith.mulf %16, %18 : vector<64x64xf32>
    %c0_18 = arith.constant 0 : index
    %c0_19 = arith.constant 0 : index
    %20 = vector.load %arg6[%c0_18, %c0_19] : memref<1x64xf32, #tpu.memory_space<vmem>>, vector<1x64xf32>
    %21 = vector.broadcast %20 : vector<1x64xf32> to vector<64x64xf32>
    %22 = arith.addf %19, %21 : vector<64x64xf32>
    %23 = vector.extract_strided_slice %22 {offsets = [0, 0], sizes = [64, 16], strides = [1, 1]} : vector<64x64xf32> to vector<64x16xf32>
    %24 = vector.shape_cast %23 : vector<64x16xf32> to vector<8x8x16xf32>
    %c0_20 = arith.constant 0 : index
    %c0_21 = arith.constant 0 : index
    %c0_22 = arith.constant 0 : index
    %c0_23 = arith.constant 0 : index
    %25 = vector.load %arg7[%c0_20, %c0_21, %c0_22, %c0_23] : memref<8x4x8x16xf32, #tpu.memory_space<vmem>>, vector<8x1x8x16xf32>
    %26 = vector.shape_cast %25 : vector<8x1x8x16xf32> to vector<8x8x16xf32>
    %27 = vector.shape_cast %24 : vector<8x8x16xf32> to vector<8x1x8x16xf32>
    tpu.vector_store %arg7[%c0_20, %c0_21, %c0_22, %c0_23], %27 {strides = array<i32>} : memref<8x4x8x16xf32, #tpu.memory_space<vmem>>, vector<8x1x8x16xf32>,
    %28 = vector.extract_strided_slice %22 {offsets = [0, 16], sizes = [64, 16], strides = [1, 1]} : vector<64x64xf32> to vector<64x16xf32>
    %29 = vector.shape_cast %28 : vector<64x16xf32> to vector<8x8x16xf32>
    %c0_24 = arith.constant 0 : index
    %c1 = arith.constant 1 : index
    %c0_25 = arith.constant 0 : index
    %c0_26 = arith.constant 0 : index
    %30 = vector.load %arg7[%c0_24, %c1, %c0_25, %c0_26] : memref<8x4x8x16xf32, #tpu.memory_space<vmem>>, vector<8x1x8x16xf32>
    %31 = vector.shape_cast %30 : vector<8x1x8x16xf32> to vector<8x8x16xf32>
    %32 = vector.shape_cast %29 : vector<8x8x16xf32> to vector<8x1x8x16xf32>
    tpu.vector_store %arg7[%c0_24, %c1, %c0_25, %c0_26], %32 {strides = array<i32>} : memref<8x4x8x16xf32, #tpu.memory_space<vmem>>, vector<8x1x8x16xf32>,
    %33 = vector.extract_strided_slice %22 {offsets = [0, 32], sizes = [64, 16], strides = [1, 1]} : vector<64x64xf32> to vector<64x16xf32>
    %34 = vector.shape_cast %33 : vector<64x16xf32> to vector<8x8x16xf32>
    %c0_27 = arith.constant 0 : index
    %c2 = arith.constant 2 : index
    %c0_28 = arith.constant 0 : index
    %c0_29 = arith.constant 0 : index
    %35 = vector.load %arg7[%c0_27, %c2, %c0_28, %c0_29] : memref<8x4x8x16xf32, #tpu.memory_space<vmem>>, vector<8x1x8x16xf32>
    %36 = vector.shape_cast %35 : vector<8x1x8x16xf32> to vector<8x8x16xf32>
    %37 = vector.shape_cast %34 : vector<8x8x16xf32> to vector<8x1x8x16xf32>
    tpu.vector_store %arg7[%c0_27, %c2, %c0_28, %c0_29], %37 {strides = array<i32>} : memref<8x4x8x16xf32, #tpu.memory_space<vmem>>, vector<8x1x8x16xf32>,
    %38 = vector.extract_strided_slice %22 {offsets = [0, 48], sizes = [64, 16], strides = [1, 1]} : vector<64x64xf32> to vector<64x16xf32>
    %39 = vector.shape_cast %38 : vector<64x16xf32> to vector<8x8x16xf32>
    %c0_30 = arith.constant 0 : index
    %c3 = arith.constant 3 : index
    %c0_31 = arith.constant 0 : index
    %c0_32 = arith.constant 0 : index
    %40 = vector.load %arg7[%c0_30, %c3, %c0_31, %c0_32] : memref<8x4x8x16xf32, #tpu.memory_space<vmem>>, vector<8x1x8x16xf32>
    %41 = vector.shape_cast %40 : vector<8x1x8x16xf32> to vector<8x8x16xf32>
    %42 = vector.shape_cast %39 : vector<8x8x16xf32> to vector<8x1x8x16xf32>
    tpu.vector_store %arg7[%c0_30, %c3, %c0_31, %c0_32], %42 {strides = array<i32>} : memref<8x4x8x16xf32, #tpu.memory_space<vmem>>, vector<8x1x8x16xf32>,
    return
  }
  func.func @transform_0(%arg0: i32) -> (i32, i32) {
    %c0_i32 = arith.constant 0 : i32
    %c0_i32_0 = arith.constant 0 : i32
    return %arg0, %c0_i32 : i32, i32
  }
  func.func @transform_1(%arg0: i32) -> (i32, i32) {
    %c0_i32 = arith.constant 0 : i32
    %c0_i32_0 = arith.constant 0 : i32
    %c0_i32_1 = arith.constant 0 : i32
    return %c0_i32, %c0_i32_0 : i32, i32
  }
  func.func @transform_2(%arg0: i32) -> (i32, i32) {
    %c0_i32 = arith.constant 0 : i32
    %c0_i32_0 = arith.constant 0 : i32
    %c0_i32_1 = arith.constant 0 : i32
    return %c0_i32, %c0_i32_0 : i32, i32
  }
  func.func @transform_3(%arg0: i32) -> (i32, i32) {
    %c0_i32 = arith.constant 0 : i32
    %c0_i32_0 = arith.constant 0 : i32
    %c0_i32_1 = arith.constant 0 : i32
    return %c0_i32, %c0_i32_0 : i32, i32
  }
  func.func @transform_4(%arg0: i32) -> (i32, i32) {
    %c0_i32 = arith.constant 0 : i32
    %c0_i32_0 = arith.constant 0 : i32
    %c0_i32_1 = arith.constant 0 : i32
    return %c0_i32, %c0_i32_0 : i32, i32
  }
  func.func @transform_5(%arg0: i32) -> (i32, i32) {
    %c0_i32 = arith.constant 0 : i32
    %c0_i32_0 = arith.constant 0 : i32
    %c0_i32_1 = arith.constant 0 : i32
    return %c0_i32, %c0_i32_0 : i32, i32
  }
  func.func @transform_6(%arg0: i32) -> (i32, i32, i32, i32) {
    %c0_i32 = arith.constant 0 : i32
    %c0_i32_0 = arith.constant 0 : i32
    %c0_i32_1 = arith.constant 0 : i32
    %c0_i32_2 = arith.constant 0 : i32
    return %arg0, %c0_i32, %c0_i32_0, %c0_i32_1 : i32, i32, i32, i32
  }
}

</mosaic_0001>

<llo_original>
// kernel: tpu_custom_call.1
$region0: #{tpu_custom_call.1}
  #allocation0 [shape = 'u32[]', space=smem, size = 0x4, offset = 0x4, fixed_abs, tag = 'smem constant byte address 0x4 - core index']
  #allocation1 [shape = 'u32[144,128]{1,0:T(1,128)}', space=vmem, size = 0x12000, scoped, tag = 'internal scratch']
  %s0 = inlined_call_operand.vmem [shape: f32[128,16], index: 0, kind: input, shape index: {}]
  %s1 = inlined_call_operand.vmem [shape: f32[16,64], index: 1, kind: input, shape index: {}]
  %s2 = inlined_call_operand.vmem [shape: f32[64,16], index: 2, kind: input, shape index: {}]
  %s3 = inlined_call_operand.vmem [shape: f32[16,64], index: 3, kind: input, shape index: {}]
  %s4 = inlined_call_operand.vmem [shape: f32[1,64], index: 4, kind: input, shape index: {}]
  %s5 = inlined_call_operand.vmem [shape: f32[1,64], index: 5, kind: input, shape index: {}]
  %s6 = inlined_call_operand.hbm [shape: f32[16,4,8,16], index: 6, kind: output, shape index: {}]
  %s7 = sld [smem:[#allocation0]]
  $region57: #{tpu_custom_call.1} parent=0
    _
  %s9 = ssub.s32 1, %s7
  %s10 = scalar_select 0, %s9, %s7
  $region1: #{tpu_custom_call.1} parent=0
    #allocation2 [shape = 'u8[262144]{0}', space=vmem, size = 0x40000, scoped, tag = 'output window, operand 0']
    #allocation3 [shape = 's32[2]{0}', space=sflag, size = 0x8, scoped, tag = 'scoped memory for tpu_custom_call.1']
    %11 = vsyncpa [#allocation3], 0
    %s12 = scalar_lea.sflag [#allocation3], 1
    %13 = vsyncpa %s12, 0
    loop: start=0, step=1, limit=4
    $region2: #{tpu_custom_call.1} parent=1 // loop_pre_header
      _
    $region3: #{tpu_custom_call.1} parent=1 // loop_header
      %s15 = sphi 0, %s19
      %p16 = scmp.ge.s32.totalorder %s15, 4
      %s25 = sphi 0, %s27
      %s28 = sphi 0, %s25
      %s29 = sphi 0, %s28
      %s45 = sphi 0, %s29
      %s49 = sphi 0, %s49
      %s51 = sphi 0, %s49
      %s52 = sphi 0, %s51
      %s66 = sphi 0, %s52
      %s70 = sphi 0, %s70
      %s72 = sphi 0, %s70
      %s73 = sphi 0, %s72
      %s87 = sphi 0, %s73
      %s91 = sphi 0, %s91
      %s93 = sphi 0, %s91
      %s94 = sphi 0, %s93
      %s108 = sphi 0, %s94
      %s112 = sphi 0, %s112
      %s114 = sphi 0, %s112
      %s115 = sphi 0, %s114
      %s129 = sphi 0, %s115
      %s133 = sphi 0, %s133
      %s135 = sphi 0, %s133
      %s136 = sphi 0, %s135
      %s150 = sphi 0, %s136
      %s156 = sphi 0, %s158
      %s159 = sphi 0, %s156
      %s160 = sphi 0, %s159
      %s176 = sphi 0, %s160
    $region4: #{tpu_custom_call.1} parent=1 // loop_header_branch
      %18 = sbr.rel (%p16) target = $region8
    $region5: #{tpu_custom_call.1} parent=1 // loop_body
      %s20 = ssub.s32 %s15, 1
      %s21 = ssub.s32 %s15, 2
      %s22 = sadd.s32 %s15, 1
      %s23 = ssub.s32 %s15, %s22
      %p24 = scmp.eq.s32.totalorder %s23, 0
      %s26 = sadd.s32 %s25, 1
      %s27 = scalar_select %p24, %s25, %s26
      %p30 = pneg %p24
      %p31 = scmp.eq.s32.totalorder %s15, 1
      %p32 = por %p30, %p31
      %p33 = scmp.ne.s32.totalorder %s25, %s28
      %p34 = scmp.eq.s32.totalorder %s15, 0
      %p35 = por %p33, %p34
      %p36 = scmp.ne.s32.totalorder %s25, %s28
      %p37 = scmp.eq.s32.totalorder %s20, 1
      %p38 = por %p36, %p37
      %p39 = scmp.ne.s32.totalorder %s28, %s29
      %p40 = scmp.eq.s32.totalorder %s20, 0
      %p41 = por %p39, %p40
      %p42 = scmp.ne.s32.totalorder %s28, %s29
      %p43 = scmp.eq.s32.totalorder %s21, 1
      %p44 = por %p42, %p43
      %p46 = scmp.ne.s32.totalorder %s29, %s45
      %p47 = scmp.eq.s32.totalorder %s21, 0
      %p48 = por %p46, %p47
      %s50 = sadd.s32 %s49, 1
      %p53 = scmp.eq.s32.totalorder %s15, 1
      %p54 = scmp.ne.s32.totalorder %s49, %s51
      %p55 = scmp.eq.s32.totalorder %s15, 0
      %p56 = por %p54, %p55
      %p57 = scmp.ne.s32.totalorder %s49, %s51
      %p58 = scmp.eq.s32.totalorder %s20, 1
      %p59 = por %p57, %p58
      %p60 = scmp.ne.s32.totalorder %s51, %s52
      %p61 = scmp.eq.s32.totalorder %s20, 0
      %p62 = por %p60, %p61
      %p63 = scmp.ne.s32.totalorder %s51, %s52
      %p64 = scmp.eq.s32.totalorder %s21, 1
      %p65 = por %p63, %p64
      %p67 = scmp.ne.s32.totalorder %s52, %s66
      %p68 = scmp.eq.s32.totalorder %s21, 0
      %p69 = por %p67, %p68
      %s71 = sadd.s32 %s70, 1
      %p74 = scmp.eq.s32.totalorder %s15, 1
      %p75 = scmp.ne.s32.totalorder %s70, %s72
      %p76 = scmp.eq.s32.totalorder %s15, 0
      %p77 = por %p75, %p76
      %p78 = scmp.ne.s32.totalorder %s70, %s72
      %p79 = scmp.eq.s32.totalorder %s20, 1
      %p80 = por %p78, %p79
      %p81 = scmp.ne.s32.totalorder %s72, %s73
      %p82 = scmp.eq.s32.totalorder %s20, 0
      %p83 = por %p81, %p82
      %p84 = scmp.ne.s32.totalorder %s72, %s73
      %p85 = scmp.eq.s32.totalorder %s21, 1
      %p86 = por %p84, %p85
      %p88 = scmp.ne.s32.totalorder %s73, %s87
      %p89 = scmp.eq.s32.totalorder %s21, 0
      %p90 = por %p88, %p89
      %s92 = sadd.s32 %s91, 1
      %p95 = scmp.eq.s32.totalorder %s15, 1
      %p96 = scmp.ne.s32.totalorder %s91, %s93
      %p97 = scmp.eq.s32.totalorder %s15, 0
      %p98 = por %p96, %p97
      %p99 = scmp.ne.s32.totalorder %s91, %s93
      %p100 = scmp.eq.s32.totalorder %s20, 1
      %p101 = por %p99, %p100
      %p102 = scmp.ne.s32.totalorder %s93, %s94
      %p103 = scmp.eq.s32.totalorder %s20, 0
      %p104 = por %p102, %p103
      %p105 = scmp.ne.s32.totalorder %s93, %s94
      %p106 = scmp.eq.s32.totalorder %s21, 1
      %p107 = por %p105, %p106
      %p109 = scmp.ne.s32.totalorder %s94, %s108
      %p110 = scmp.eq.s32.totalorder %s21, 0
      %p111 = por %p109, %p110
      %s113 = sadd.s32 %s112, 1
      %p116 = scmp.eq.s32.totalorder %s15, 1
      %p117 = scmp.ne.s32.totalorder %s112, %s114
      %p118 = scmp.eq.s32.totalorder %s15, 0
      %p119 = por %p117, %p118
      %p120 = scmp.ne.s32.totalorder %s112, %s114
      %p121 = scmp.eq.s32.totalorder %s20, 1
      %p122 = por %p120, %p121
      %p123 = scmp.ne.s32.totalorder %s114, %s115
      %p124 = scmp.eq.s32.totalorder %s20, 0
      %p125 = por %p123, %p124
      %p126 = scmp.ne.s32.totalorder %s114, %s115
      %p127 = scmp.eq.s32.totalorder %s21, 1
      %p128 = por %p126, %p127
      %p130 = scmp.ne.s32.totalorder %s115, %s129
      %p131 = scmp.eq.s32.totalorder %s21, 0
      %p132 = por %p130, %p131
      %s134 = sadd.s32 %s133, 1
      %p137 = scmp.eq.s32.totalorder %s15, 1
      %p138 = scmp.ne.s32.totalorder %s133, %s135
      %p139 = scmp.eq.s32.totalorder %s15, 0
      %p140 = por %p138, %p139
      %p141 = scmp.ne.s32.totalorder %s133, %s135
      %p142 = scmp.eq.s32.totalorder %s20, 1
      %p143 = por %p141, %p142
      %p144 = scmp.ne.s32.totalorder %s135, %s136
      %p145 = scmp.eq.s32.totalorder %s20, 0
      %p146 = por %p144, %p145
      %p147 = scmp.ne.s32.totalorder %s135, %s136
      %p148 = scmp.eq.s32.totalorder %s21, 1
      %p149 = por %p147, %p148
      %p151 = scmp.ne.s32.totalorder %s136, %s150
      %p152 = scmp.eq.s32.totalorder %s21, 0
      %p153 = por %p151, %p152
      %s154 = ssub.s32 %s15, %s22
      %p155 = scmp.eq.s32.totalorder %s154, 0
      %s157 = sadd.s32 %s156, 1
      %s158 = scalar_select %p155, %s156, %s157
      %p161 = pneg %p155
      %p162 = scmp.eq.s32.totalorder %s15, 1
      %p163 = por %p161, %p162
      %p164 = scmp.ne.s32.totalorder %s156, %s159
      %p165 = scmp.eq.s32.totalorder %s15, 0
      %p166 = por %p164, %p165
      %p167 = scmp.ne.s32.totalorder %s156, %s159
      %p168 = scmp.eq.s32.totalorder %s20, 1
      %p169 = por %p167, %p168
      %p170 = scmp.ne.s32.totalorder %s159, %s160
      %p171 = scmp.eq.s32.totalorder %s20, 0
      %p172 = por %p170, %p171
      %p173 = scmp.ne.s32.totalorder %s159, %s160
      %p174 = scmp.eq.s32.totalorder %s21, 1
      %p175 = por %p173, %p174
      %p177 = scmp.ne.s32.totalorder %s160, %s176
      %p178 = scmp.eq.s32.totalorder %s21, 0
      %p179 = por %p177, %p178
      %p180 = scmp.le.s32.totalorder 1, %s15
      %p181 = scmp.lt.s32.totalorder %s15, 3
      %p182 = pnand %p180, %p181
      %p183 = pneg %p182
      // Predicated region
      $region9: #{tpu_custom_call.1} parent=5 // pred_check
        _
      $region10: #{tpu_custom_call.1} parent=5 // pred_check_branch
        %185 = sbr.rel (%p182) target = $region12
      $region11: #{tpu_custom_call.1} parent=5 // pred_region
        %s186 = ssub.s32 %s15, 1
        // Predicated region
        $region13: #{tpu_custom_call.1} parent=11 // pred_check
          %p187 = pneg %p62
        $region14: #{tpu_custom_call.1} parent=11 // pred_check_branch
          %189 = sbr.rel (%p187) target = $region16
        $region15: #{tpu_custom_call.1} parent=11 // pred_region
          _
        $region16: #{tpu_custom_call.1} parent=11 // pred_fallthru
          _
        // Predicated region
        $region17: #{tpu_custom_call.1} parent=11 // pred_check
          %p190 = pneg %p83
        $region18: #{tpu_custom_call.1} parent=11 // pred_check_branch
          %192 = sbr.rel (%p190) target = $region20
        $region19: #{tpu_custom_call.1} parent=11 // pred_region
          _
        $region20: #{tpu_custom_call.1} parent=11 // pred_fallthru
          _
        // Predicated region
        $region21: #{tpu_custom_call.1} parent=11 // pred_check
          %p193 = pneg %p104
        $region22: #{tpu_custom_call.1} parent=11 // pred_check_branch
          %195 = sbr.rel (%p193) target = $region24
        $region23: #{tpu_custom_call.1} parent=11 // pred_region
          _
        $region24: #{tpu_custom_call.1} parent=11 // pred_fallthru
          _
        // Predicated region
        $region25: #{tpu_custom_call.1} parent=11 // pred_check
          %p196 = pneg %p125
        $region26: #{tpu_custom_call.1} parent=11 // pred_check_branch
          %198 = sbr.rel (%p196) target = $region28
        $region27: #{tpu_custom_call.1} parent=11 // pred_region
          _
        $region28: #{tpu_custom_call.1} parent=11 // pred_fallthru
          _
        // Predicated region
        $region29: #{tpu_custom_call.1} parent=11 // pred_check
          %p199 = pneg %p146
        $region30: #{tpu_custom_call.1} parent=11 // pred_check_branch
          %201 = sbr.rel (%p199) target = $region32
        $region31: #{tpu_custom_call.1} parent=11 // pred_region
          _
        $region32: #{tpu_custom_call.1} parent=11 // pred_fallthru
          _
      $region12: #{tpu_custom_call.1} parent=5 // pred_fallthru
        _
      %p202 = scmp.lt.s32.totalorder %s15, 2
      // Predicated region
      $region33: #{tpu_custom_call.1} parent=5 // pred_check
        %p203 = pneg %p202
      $region34: #{tpu_custom_call.1} parent=5 // pred_check_branch
        %205 = sbr.rel (%p203) target = $region36
      $region35: #{tpu_custom_call.1} parent=5 // pred_region
        // Predicated region
        $region37: #{tpu_custom_call.1} parent=35 // pred_check
          %p206 = pneg %p35
        $region38: #{tpu_custom_call.1} parent=35 // pred_check_branch
          %208 = sbr.rel (%p206) target = $region40
        $region39: #{tpu_custom_call.1} parent=35 // pred_region
          %s209 = smul.u32 8, %s15
          %p210 = scmp.lt.s32.totalorder %s209, 15
          %s211 = scalar_select %p210, %s209, 15
          %s212 = smul.addr %s211, 8
          %s213 = scalar_lea.vmem %s0, %s212
          %s214 = smul.u32 8, %s15
        $region40: #{tpu_custom_call.1} parent=35 // pred_fallthru
          _
      $region36: #{tpu_custom_call.1} parent=5 // pred_fallthru
        _
      %p215 = scmp.le.s32.totalorder 1, %s15
      %p216 = scmp.lt.s32.totalorder %s15, 3
      %p217 = pnand %p215, %p216
      %p218 = pneg %p217
      // Predicated region
      $region41: #{tpu_custom_call.1} parent=5 // pred_check
        _
      $region42: #{tpu_custom_call.1} parent=5 // pred_check_branch
        %220 = sbr.rel (%p217) target = $region44
      $region43: #{tpu_custom_call.1} parent=5 // pred_region
        %s221 = ssub.s32 %s15, 1
        %s222 = smul.u32 8, %s20
        %p223 = scmp.lt.s32.totalorder %s222, 15
        %s224 = scalar_select %p223, %s222, 15
        %s225 = smul.addr %s224, 8
        %s226 = scalar_lea.vmem %s0, %s225
        %p227 = pneg %p41
        %p228 = pneg %p38
        %p229 = pneg %p62
        %p230 = pneg %p59
        %p231 = pneg %p83
        %p232 = pneg %p80
        %p233 = pneg %p104
        %p234 = pneg %p101
        %p235 = pneg %p125
        %p236 = pneg %p122
        %p237 = pneg %p146
        %p238 = pneg %p143
        %p239 = pneg %p172
        %p240 = pneg %p169
        %s241 = sand.u32 %s159, 1
        %s242 = scalar_lea.sflag [#allocation3], %s241
        %s243 = sand.u32 %s159, 1
        %s244 = smul.addr %s243, 256
        %s245 = scalar_lea.vmem [#allocation2], %s244
        %s246 = smul.u32 8, %s20
        %p247 = scmp.lt.s32.totalorder %s246, 15
        %s248 = scalar_select %p247, %s246, 15
        %s249 = smul.addr %s248, 8
        %s250 = scalar_lea.vmem %s0, %s249
        %s251 = smul.u32 8, %s20
        %s252 = smul.u32 8, %s20
        %v253 = vld [vmem:[%s250] sm:$0xff]
        %v254 = vld [vmem:[%s250 + $0x8] sm:$0xff]
        %v255 = vld [vmem:[%s250 + $0x10] sm:$0xff]
        %v256 = vld [vmem:[%s250 + $0x18] sm:$0xff]
        %v257 = vld [vmem:[%s250 + $0x20] sm:$0xff]
        %v258 = vld [vmem:[%s250 + $0x28] sm:$0xff]
        %v259 = vld [vmem:[%s250 + $0x30] sm:$0xff]
        %v260 = vld [vmem:[%s250 + $0x38] sm:$0xff]
        %v261 = vld [vmem:[%s1] sm:$0xff]
        %v262 = vld [vmem:[%s1 + $0x8] sm:$0xff]
        %vm263 = vcmask 130048
        %v265 = vsel %vm263, %v253, 0
        %v268 = vsel %vm263, %v254, 0
        %v271 = vsel %vm263, %v255, 0
        %v274 = vsel %vm263, %v256, 0
        %v277 = vsel %vm263, %v257, 0
        %v280 = vsel %vm263, %v258, 0
        %v283 = vsel %vm263, %v259, 0
        %v286 = vsel %vm263, %v260, 0
        %288 = vmatprep.subr.mxu0 0.0
        %289 = vmatpush1.msra.mxu0 0.0
        %290 = vmatprep.subr.mxu0 0.0
        %291 = vmatpush1.msra.mxu0 0.0
        %292 = vmatprep.subr.mxu0 0.0
        %293 = vmatpush1.msra.mxu0 0.0
        %294 = vmatprep.subr.mxu0 0.0
        %295 = vmatpush1.msra.mxu0 0.0
        %296 = vmatprep.subr.mxu0 0.0
        %297 = vmatpush1.msra.mxu0 0.0
        %298 = vmatprep.subr.mxu0 0.0
        %299 = vmatpush1.msra.mxu0 0.0
        %300 = vmatprep.subr.mxu0 0.0
        %301 = vmatpush1.msra.mxu0 0.0
        %302 = vmatprep.subr.mxu0 0.0
        %303 = vmatpush1.msra.mxu0 0.0
        %304 = vmatprep.subr.mxu0 0.0
        %305 = vmatpush1.msra.mxu0 0.0
        %306 = vmatprep.subr.mxu0 0.0
        %307 = vmatpush1.msra.mxu0 0.0
        %308 = vmatprep.subr.mxu0 0.0
        %309 = vmatpush1.msra.mxu0 0.0
        %310 = vmatprep.subr.mxu0 0.0
        %311 = vmatpush1.msra.mxu0 0.0
        %312 = vmatprep.subr.mxu0 0.0
        %313 = vmatpush1.msra.mxu0 0.0
        %314 = vmatprep.subr.mxu0 0.0
        %315 = vmatpush1.msra.mxu0 0.0
        %316 = vmatprep.subr.mxu0 0.0
        %317 = vmatpush1.msra.mxu0 %v262
        %318 = vmatprep.subr.mxu0 0.0
        %319 = vmatpush1.msra.mxu0 %v261
        %320 = vmatprep.subr.mxu0 0.0
        %321 = vmatpush2.msra.mxu0 0.0
        %322 = vmatprep.subr.mxu0 0.0
        %323 = vmatpush2.msra.mxu0 0.0
        %324 = vmatprep.subr.mxu0 0.0
        %325 = vmatpush2.msra.mxu0 0.0
        %326 = vmatprep.subr.mxu0 0.0
        %327 = vmatpush2.msra.mxu0 0.0
        %328 = vmatprep.subr.mxu0 0.0
        %329 = vmatpush2.msra.mxu0 0.0
        %330 = vmatprep.subr.mxu0 0.0
        %331 = vmatpush2.msra.mxu0 0.0
        %332 = vmatprep.subr.mxu0 0.0
        %333 = vmatpush2.msra.mxu0 0.0
        %334 = vmatprep.subr.mxu0 0.0
        %335 = vmatpush2.msra.mxu0 0.0
        %336 = vmatprep.subr.mxu0 0.0
        %337 = vmatpush2.msra.mxu0 0.0
        %338 = vmatprep.subr.mxu0 0.0
        %339 = vmatpush2.msra.mxu0 0.0
        %340 = vmatprep.subr.mxu0 0.0
        %341 = vmatpush2.msra.mxu0 0.0
        %342 = vmatprep.subr.mxu0 0.0
        %343 = vmatpush2.msra.mxu0 0.0
        %344 = vmatprep.subr.mxu0 0.0
        %345 = vmatpush2.msra.mxu0 0.0
        %346 = vmatprep.subr.mxu0 0.0
        %347 = vmatpush2.msra.mxu0 0.0
        %348 = vmatprep.subr.mxu0 0.0
        %349 = vmatpush2.msra.mxu0 0.0
        %350 = vmatprep.subr.mxu0 0.0
        %351 = vmatpush2.msra.mxu0 0.0
        %352 = vmatprep.mubr.f32.mxu0 0.0
        %353 = vmatmul.mubr.f32.gmra.mxu0 %v265
        %v354 = vpop.f32.mrf.mxu0
        %v355 = vadd.f32 0.0, %v354
        %v356 = vpop.f32.mrf.mxu0
        %357 = vmatprep.mubr.f32.mxu0 0.0
        %358 = vmatmul.mubr.f32.gmra.mxu0 %v268
        %v359 = vpop.f32.mrf.mxu0
        %v360 = vadd.f32 0.0, %v359
        %v361 = vpop.f32.mrf.mxu0
        %362 = vmatprep.mubr.f32.mxu0 0.0
        %363 = vmatmul.mubr.f32.gmra.mxu0 %v271
        %v364 = vpop.f32.mrf.mxu0
        %v365 = vadd.f32 0.0, %v364
        %v366 = vpop.f32.mrf.mxu0
        %367 = vmatprep.mubr.f32.mxu0 0.0
        %368 = vmatmul.mubr.f32.gmra.mxu0 %v274
        %v369 = vpop.f32.mrf.mxu0
        %v370 = vadd.f32 0.0, %v369
        %v371 = vpop.f32.mrf.mxu0
        %372 = vmatprep.mubr.f32.mxu0 0.0
        %373 = vmatmul.mubr.f32.gmra.mxu0 %v277
        %v374 = vpop.f32.mrf.mxu0
        %v375 = vadd.f32 0.0, %v374
        %v376 = vpop.f32.mrf.mxu0
        %377 = vmatprep.mubr.f32.mxu0 0.0
        %378 = vmatmul.mubr.f32.gmra.mxu0 %v280
        %v379 = vpop.f32.mrf.mxu0
        %v380 = vadd.f32 0.0, %v379
        %v381 = vpop.f32.mrf.mxu0
        %382 = vmatprep.mubr.f32.mxu0 0.0
        %383 = vmatmul.mubr.f32.gmra.mxu0 %v283
        %v384 = vpop.f32.mrf.mxu0
        %v385 = vadd.f32 0.0, %v384
        %v386 = vpop.f32.mrf.mxu0
        %387 = vmatprep.mubr.f32.mxu0 0.0
        %388 = vmatmul.mubr.f32.gmra.mxu0 %v286
        %v389 = vpop.f32.mrf.mxu0
        %v390 = vadd.f32 0.0, %v389
        %v391 = vpop.f32.mrf.mxu0
        %392 = vdwg.mxu0
        %v393 = vld [vmem:[%s2] sm:$0xff]
        %v394 = vld [vmem:[%s2 + $0x8] sm:$0xff]
        %v395 = vld [vmem:[%s2 + $0x10] sm:$0xff]
        %v396 = vld [vmem:[%s2 + $0x18] sm:$0xff]
        %v397 = vld [vmem:[%s2 + $0x20] sm:$0xff]
        %v398 = vld [vmem:[%s2 + $0x28] sm:$0xff]
        %v399 = vld [vmem:[%s2 + $0x30] sm:$0xff]
        %v400 = vld [vmem:[%s2 + $0x38] sm:$0xff]
        %vm401 = vcmask 523264
        %v403 = vsel %vm401, %v355, 0
        %v406 = vsel %vm401, %v360, 0
        %v409 = vsel %vm401, %v365, 0
        %v412 = vsel %vm401, %v370, 0
        %v415 = vsel %vm401, %v375, 0
        %v418 = vsel %vm401, %v380, 0
        %v421 = vsel %vm401, %v385, 0
        %v424 = vsel %vm401, %v390, 0
        %426 = vmatprep.subr.mxu0 0.0
        %427 = vmatpush1.msra.mxu0 0.0
        %428 = vmatprep.subr.mxu0 0.0
        %429 = vmatpush1.msra.mxu0 0.0
        %430 = vmatprep.subr.mxu0 0.0
        %431 = vmatpush1.msra.mxu0 0.0
        %432 = vmatprep.subr.mxu0 0.0
        %433 = vmatpush1.msra.mxu0 0.0
        %434 = vmatprep.subr.mxu0 0.0
        %435 = vmatpush1.msra.mxu0 0.0
        %436 = vmatprep.subr.mxu0 0.0
        %437 = vmatpush1.msra.mxu0 0.0
        %438 = vmatprep.subr.mxu0 0.0
        %439 = vmatpush1.msra.mxu0 0.0
        %440 = vmatprep.subr.mxu0 0.0
        %441 = vmatpush1.msra.mxu0 0.0
        %442 = vmatprep.subr.mxu0 0.0
        %443 = vmatpush1.msra.mxu0 %v400
        %444 = vmatprep.subr.mxu0 0.0
        %445 = vmatpush1.msra.mxu0 %v399
        %446 = vmatprep.subr.mxu0 0.0
        %447 = vmatpush1.msra.mxu0 %v398
        %448 = vmatprep.subr.mxu0 0.0
        %449 = vmatpush1.msra.mxu0 %v397
        %450 = vmatprep.subr.mxu0 0.0
        %451 = vmatpush1.msra.mxu0 %v396
        %452 = vmatprep.subr.mxu0 0.0
        %453 = vmatpush1.msra.mxu0 %v395
        %454 = vmatprep.subr.mxu0 0.0
        %455 = vmatpush1.msra.mxu0 %v394
        %456 = vmatprep.subr.mxu0 0.0
        %457 = vmatpush1.msra.mxu0 %v393
        %458 = vmatprep.subr.mxu0 0.0
        %459 = vmatpush2.msra.mxu0 0.0
        %460 = vmatprep.subr.mxu0 0.0
        %461 = vmatpush2.msra.mxu0 0.0
        %462 = vmatprep.subr.mxu0 0.0
        %463 = vmatpush2.msra.mxu0 0.0
        %464 = vmatprep.subr.mxu0 0.0
        %465 = vmatpush2.msra.mxu0 0.0
        %466 = vmatprep.subr.mxu0 0.0
        %467 = vmatpush2.msra.mxu0 0.0
        %468 = vmatprep.subr.mxu0 0.0
        %469 = vmatpush2.msra.mxu0 0.0
        %470 = vmatprep.subr.mxu0 0.0
        %471 = vmatpush2.msra.mxu0 0.0
        %472 = vmatprep.subr.mxu0 0.0
        %473 = vmatpush2.msra.mxu0 0.0
        %474 = vmatprep.subr.mxu0 0.0
        %475 = vmatpush2.msra.mxu0 0.0
        %476 = vmatprep.subr.mxu0 0.0
        %477 = vmatpush2.msra.mxu0 0.0
        %478 = vmatprep.subr.mxu0 0.0
        %479 = vmatpush2.msra.mxu0 0.0
        %480 = vmatprep.subr.mxu0 0.0
        %481 = vmatpush2.msra.mxu0 0.0
        %482 = vmatprep.subr.mxu0 0.0
        %483 = vmatpush2.msra.mxu0 0.0
        %484 = vmatprep.subr.mxu0 0.0
        %485 = vmatpush2.msra.mxu0 0.0
        %486 = vmatprep.subr.mxu0 0.0
        %487 = vmatpush2.msra.mxu0 0.0
        %488 = vmatprep.subr.mxu0 0.0
        %489 = vmatpush2.msra.mxu0 0.0
        %490 = vmatprep.mubr.f32.mxu0 0.0
        %491 = vmatmul.mubr.f32.gmra.mxu0 %v403
        %v492 = vpop.f32.mrf.mxu0
        %v493 = vadd.f32 0.0, %v492
        %v494 = vpop.f32.mrf.mxu0
        %495 = vmatprep.mubr.f32.mxu0 0.0
        %496 = vmatmul.mubr.f32.gmra.mxu0 %v406
        %v497 = vpop.f32.mrf.mxu0
        %v498 = vadd.f32 0.0, %v497
        %v499 = vpop.f32.mrf.mxu0
        %500 = vmatprep.mubr.f32.mxu0 0.0
        %501 = vmatmul.mubr.f32.gmra.mxu0 %v409
        %v502 = vpop.f32.mrf.mxu0
        %v503 = vadd.f32 0.0, %v502
        %v504 = vpop.f32.mrf.mxu0
        %505 = vmatprep.mubr.f32.mxu0 0.0
        %506 = vmatmul.mubr.f32.gmra.mxu0 %v412
        %v507 = vpop.f32.mrf.mxu0
        %v508 = vadd.f32 0.0, %v507
        %v509 = vpop.f32.mrf.mxu0
        %510 = vmatprep.mubr.f32.mxu0 0.0
        %511 = vmatmul.mubr.f32.gmra.mxu0 %v415
        %v512 = vpop.f32.mrf.mxu0
        %v513 = vadd.f32 0.0, %v512
        %v514 = vpop.f32.mrf.mxu0
        %515 = vmatprep.mubr.f32.mxu0 0.0
        %516 = vmatmul.mubr.f32.gmra.mxu0 %v418
        %v517 = vpop.f32.mrf.mxu0
        %v518 = vadd.f32 0.0, %v517
        %v519 = vpop.f32.mrf.mxu0
        %520 = vmatprep.mubr.f32.mxu0 0.0
        %521 = vmatmul.mubr.f32.gmra.mxu0 %v421
        %v522 = vpop.f32.mrf.mxu0
        %v523 = vadd.f32 0.0, %v522
        %v524 = vpop.f32.mrf.mxu0
        %525 = vmatprep.mubr.f32.mxu0 0.0
        %526 = vmatmul.mubr.f32.gmra.mxu0 %v424
        %v527 = vpop.f32.mrf.mxu0
        %v528 = vadd.f32 0.0, %v527
        %v529 = vpop.f32.mrf.mxu0
        %530 = vdwg.mxu0
        %v531 = vld [vmem:[%s3] sm:$0xff]
        %v532 = vld [vmem:[%s3 + $0x8] sm:$0xff]
        %v534 = vsel %vm263, %v493, 0
        %v537 = vsel %vm263, %v498, 0
        %v540 = vsel %vm263, %v503, 0
        %v543 = vsel %vm263, %v508, 0
        %v546 = vsel %vm263, %v513, 0
        %v549 = vsel %vm263, %v518, 0
        %v552 = vsel %vm263, %v523, 0
        %v555 = vsel %vm263, %v528, 0
        %557 = vmatprep.subr.mxu0 0.0
        %558 = vmatpush1.msra.mxu0 0.0
        %559 = vmatprep.subr.mxu0 0.0
        %560 = vmatpush1.msra.mxu0 0.0
        %561 = vmatprep.subr.mxu0 0.0
        %562 = vmatpush1.msra.mxu0 0.0
        %563 = vmatprep.subr.mxu0 0.0
        %564 = vmatpush1.msra.mxu0 0.0
        %565 = vmatprep.subr.mxu0 0.0
        %566 = vmatpush1.msra.mxu0 0.0
        %567 = vmatprep.subr.mxu0 0.0
        %568 = vmatpush1.msra.mxu0 0.0
        %569 = vmatprep.subr.mxu0 0.0
        %570 = vmatpush1.msra.mxu0 0.0
        %571 = vmatprep.subr.mxu0 0.0
        %572 = vmatpush1.msra.mxu0 0.0
        %573 = vmatprep.subr.mxu0 0.0
        %574 = vmatpush1.msra.mxu0 0.0
        %575 = vmatprep.subr.mxu0 0.0
        %576 = vmatpush1.msra.mxu0 0.0
        %577 = vmatprep.subr.mxu0 0.0
        %578 = vmatpush1.msra.mxu0 0.0
        %579 = vmatprep.subr.mxu0 0.0
        %580 = vmatpush1.msra.mxu0 0.0
        %581 = vmatprep.subr.mxu0 0.0
        %582 = vmatpush1.msra.mxu0 0.0
        %583 = vmatprep.subr.mxu0 0.0
        %584 = vmatpush1.msra.mxu0 0.0
        %585 = vmatprep.subr.mxu0 0.0
        %586 = vmatpush1.msra.mxu0 %v532
        %587 = vmatprep.subr.mxu0 0.0
        %588 = vmatpush1.msra.mxu0 %v531
        %589 = vmatprep.subr.mxu0 0.0
        %590 = vmatpush2.msra.mxu0 0.0
        %591 = vmatprep.subr.mxu0 0.0
        %592 = vmatpush2.msra.mxu0 0.0
        %593 = vmatprep.subr.mxu0 0.0
        %594 = vmatpush2.msra.mxu0 0.0
        %595 = vmatprep.subr.mxu0 0.0
        %596 = vmatpush2.msra.mxu0 0.0
        %597 = vmatprep.subr.mxu0 0.0
        %598 = vmatpush2.msra.mxu0 0.0
        %599 = vmatprep.subr.mxu0 0.0
        %600 = vmatpush2.msra.mxu0 0.0
        %601 = vmatprep.subr.mxu0 0.0
        %602 = vmatpush2.msra.mxu0 0.0
        %603 = vmatprep.subr.mxu0 0.0
        %604 = vmatpush2.msra.mxu0 0.0
        %605 = vmatprep.subr.mxu0 0.0
        %606 = vmatpush2.msra.mxu0 0.0
        %607 = vmatprep.subr.mxu0 0.0
        %608 = vmatpush2.msra.mxu0 0.0
        %609 = vmatprep.subr.mxu0 0.0
        %610 = vmatpush2.msra.mxu0 0.0
        %611 = vmatprep.subr.mxu0 0.0
        %612 = vmatpush2.msra.mxu0 0.0
        %613 = vmatprep.subr.mxu0 0.0
        %614 = vmatpush2.msra.mxu0 0.0
        %615 = vmatprep.subr.mxu0 0.0
        %616 = vmatpush2.msra.mxu0 0.0
        %617 = vmatprep.subr.mxu0 0.0
        %618 = vmatpush2.msra.mxu0 0.0
        %619 = vmatprep.subr.mxu0 0.0
        %620 = vmatpush2.msra.mxu0 0.0
        %621 = vmatprep.mubr.f32.mxu0 0.0
        %622 = vmatmul.mubr.f32.gmra.mxu0 %v534
        %v623 = vpop.f32.mrf.mxu0
        %v624 = vadd.f32 0.0, %v623
        %v625 = vpop.f32.mrf.mxu0
        %626 = vmatprep.mubr.f32.mxu0 0.0
        %627 = vmatmul.mubr.f32.gmra.mxu0 %v537
        %v628 = vpop.f32.mrf.mxu0
        %v629 = vadd.f32 0.0, %v628
        %v630 = vpop.f32.mrf.mxu0
        %631 = vmatprep.mubr.f32.mxu0 0.0
        %632 = vmatmul.mubr.f32.gmra.mxu0 %v540
        %v633 = vpop.f32.mrf.mxu0
        %v634 = vadd.f32 0.0, %v633
        %v635 = vpop.f32.mrf.mxu0
        %636 = vmatprep.mubr.f32.mxu0 0.0
        %637 = vmatmul.mubr.f32.gmra.mxu0 %v543
        %v638 = vpop.f32.mrf.mxu0
        %v639 = vadd.f32 0.0, %v638
        %v640 = vpop.f32.mrf.mxu0
        %641 = vmatprep.mubr.f32.mxu0 0.0
        %642 = vmatmul.mubr.f32.gmra.mxu0 %v546
        %v643 = vpop.f32.mrf.mxu0
        %v644 = vadd.f32 0.0, %v643
        %v645 = vpop.f32.mrf.mxu0
        %646 = vmatprep.mubr.f32.mxu0 0.0
        %647 = vmatmul.mubr.f32.gmra.mxu0 %v549
        %v648 = vpop.f32.mrf.mxu0
        %v649 = vadd.f32 0.0, %v648
        %v650 = vpop.f32.mrf.mxu0
        %651 = vmatprep.mubr.f32.mxu0 0.0
        %652 = vmatmul.mubr.f32.gmra.mxu0 %v552
        %v653 = vpop.f32.mrf.mxu0
        %v654 = vadd.f32 0.0, %v653
        %v655 = vpop.f32.mrf.mxu0
        %656 = vmatprep.mubr.f32.mxu0 0.0
        %657 = vmatmul.mubr.f32.gmra.mxu0 %v555
        %v658 = vpop.f32.mrf.mxu0
        %v659 = vadd.f32 0.0, %v658
        %v660 = vpop.f32.mrf.mxu0
        %661 = vdwg.mxu0
        %v662 = vsub.f32 %v355, %v624
        %v663 = vsub.f32 %v360, %v629
        %v664 = vsub.f32 %v365, %v634
        %v665 = vsub.f32 %v370, %v639
        %v666 = vsub.f32 %v375, %v644
        %v667 = vsub.f32 %v380, %v649
        %v668 = vsub.f32 %v385, %v654
        %v669 = vsub.f32 %v390, %v659
        %v670 = vmul.f32 %v662, %v662
        %v671 = vmul.f32 %v663, %v663
        %v672 = vmul.f32 %v664, %v664
        %v673 = vmul.f32 %v665, %v665
        %v674 = vmul.f32 %v666, %v666
        %v675 = vmul.f32 %v667, %v667
        %v676 = vmul.f32 %v668, %v668
        %v677 = vmul.f32 %v669, %v669
        %v679 = vsel %vm401, %v670, 0
        %v682 = vsel %vm401, %v671, 0
        %v685 = vsel %vm401, %v672, 0
        %v688 = vsel %vm401, %v673, 0
        %v691 = vsel %vm401, %v674, 0
        %v694 = vsel %vm401, %v675, 0
        %v697 = vsel %vm401, %v676, 0
        %v700 = vsel %vm401, %v677, 0
        %702 = vmatprep.subr.mxu0 0.0
        %703 = vmatpush1.msra.mxu0 0.0
        %704 = vmatprep.subr.mxu0 0.0
        %705 = vmatpush1.msra.mxu0 0.0
        %706 = vmatprep.subr.mxu0 0.0
        %707 = vmatpush1.msra.mxu0 0.0
        %708 = vmatprep.subr.mxu0 0.0
        %709 = vmatpush1.msra.mxu0 0.0
        %710 = vmatprep.subr.mxu0 0.0
        %711 = vmatpush1.msra.mxu0 0.0
        %712 = vmatprep.subr.mxu0 0.0
        %713 = vmatpush1.msra.mxu0 0.0
        %714 = vmatprep.subr.mxu0 0.0
        %715 = vmatpush1.msra.mxu0 0.0
        %716 = vmatprep.subr.mxu0 0.0
        %717 = vmatpush1.msra.mxu0 0.0
        %718 = vmatprep.subr.mxu0 0.0
        %719 = vmatpush1.msra.mxu0 %v400
        %720 = vmatprep.subr.mxu0 0.0
        %721 = vmatpush1.msra.mxu0 %v399
        %722 = vmatprep.subr.mxu0 0.0
        %723 = vmatpush1.msra.mxu0 %v398
        %724 = vmatprep.subr.mxu0 0.0
        %725 = vmatpush1.msra.mxu0 %v397
        %726 = vmatprep.subr.mxu0 0.0
        %727 = vmatpush1.msra.mxu0 %v396
        %728 = vmatprep.subr.mxu0 0.0
        %729 = vmatpush1.msra.mxu0 %v395
        %730 = vmatprep.subr.mxu0 0.0
        %731 = vmatpush1.msra.mxu0 %v394
        %732 = vmatprep.subr.mxu0 0.0
        %733 = vmatpush1.msra.mxu0 %v393
        %734 = vmatprep.subr.mxu0 0.0
        %735 = vmatpush2.msra.mxu0 0.0
        %736 = vmatprep.subr.mxu0 0.0
        %737 = vmatpush2.msra.mxu0 0.0
        %738 = vmatprep.subr.mxu0 0.0
        %739 = vmatpush2.msra.mxu0 0.0
        %740 = vmatprep.subr.mxu0 0.0
        %741 = vmatpush2.msra.mxu0 0.0
        %742 = vmatprep.subr.mxu0 0.0
        %743 = vmatpush2.msra.mxu0 0.0
        %744 = vmatprep.subr.mxu0 0.0
        %745 = vmatpush2.msra.mxu0 0.0
        %746 = vmatprep.subr.mxu0 0.0
        %747 = vmatpush2.msra.mxu0 0.0
        %748 = vmatprep.subr.mxu0 0.0
        %749 = vmatpush2.msra.mxu0 0.0
        %750 = vmatprep.subr.mxu0 0.0
        %751 = vmatpush2.msra.mxu0 0.0
        %752 = vmatprep.subr.mxu0 0.0
        %753 = vmatpush2.msra.mxu0 0.0
        %754 = vmatprep.subr.mxu0 0.0
        %755 = vmatpush2.msra.mxu0 0.0
        %756 = vmatprep.subr.mxu0 0.0
        %757 = vmatpush2.msra.mxu0 0.0
        %758 = vmatprep.subr.mxu0 0.0
        %759 = vmatpush2.msra.mxu0 0.0
        %760 = vmatprep.subr.mxu0 0.0
        %761 = vmatpush2.msra.mxu0 0.0
        %762 = vmatprep.subr.mxu0 0.0
        %763 = vmatpush2.msra.mxu0 0.0
        %764 = vmatprep.subr.mxu0 0.0
        %765 = vmatpush2.msra.mxu0 0.0
        %766 = vmatprep.mubr.f32.mxu0 0.0
        %767 = vmatmul.mubr.f32.gmra.mxu0 %v679
        %v768 = vpop.f32.mrf.mxu0
        %v769 = vadd.f32 1e-05, %v768
        %v770 = vpop.f32.mrf.mxu0
        %771 = vmatprep.mubr.f32.mxu0 0.0
        %772 = vmatmul.mubr.f32.gmra.mxu0 %v682
        %v773 = vpop.f32.mrf.mxu0
        %v774 = vadd.f32 1e-05, %v773
        %v775 = vpop.f32.mrf.mxu0
        %776 = vmatprep.mubr.f32.mxu0 0.0
        %777 = vmatmul.mubr.f32.gmra.mxu0 %v685
        %v778 = vpop.f32.mrf.mxu0
        %v779 = vadd.f32 1e-05, %v778
        %v780 = vpop.f32.mrf.mxu0
        %781 = vmatprep.mubr.f32.mxu0 0.0
        %782 = vmatmul.mubr.f32.gmra.mxu0 %v688
        %v783 = vpop.f32.mrf.mxu0
        %v784 = vadd.f32 1e-05, %v783
        %v785 = vpop.f32.mrf.mxu0
        %786 = vmatprep.mubr.f32.mxu0 0.0
        %787 = vmatmul.mubr.f32.gmra.mxu0 %v691
        %v788 = vpop.f32.mrf.mxu0
        %v789 = vadd.f32 1e-05, %v788
        %v790 = vpop.f32.mrf.mxu0
        %791 = vmatprep.mubr.f32.mxu0 0.0
        %792 = vmatmul.mubr.f32.gmra.mxu0 %v694
        %v793 = vpop.f32.mrf.mxu0
        %v794 = vadd.f32 1e-05, %v793
        %v795 = vpop.f32.mrf.mxu0
        %796 = vmatprep.mubr.f32.mxu0 0.0
        %797 = vmatmul.mubr.f32.gmra.mxu0 %v697
        %v798 = vpop.f32.mrf.mxu0
        %v799 = vadd.f32 1e-05, %v798
        %v800 = vpop.f32.mrf.mxu0
        %801 = vmatprep.mubr.f32.mxu0 0.0
        %802 = vmatmul.mubr.f32.gmra.mxu0 %v700
        %v803 = vpop.f32.mrf.mxu0
        %v804 = vadd.f32 1e-05, %v803
        %v805 = vpop.f32.mrf.mxu0
        %806 = vdwg.mxu0
        %v807 = vrsqrt.pop %v769
        %v808 = vrsqrt.pop %v774
        %v809 = vrsqrt.pop %v779
        %v810 = vrsqrt.pop %v784
        %v811 = vrsqrt.pop %v789
        %v812 = vrsqrt.pop %v794
        %v813 = vrsqrt.pop %v799
        %v814 = vrsqrt.pop %v804
        %v816 = vsel %vm263, %v807, 0
        %v819 = vsel %vm263, %v808, 0
        %v822 = vsel %vm263, %v809, 0
        %v825 = vsel %vm263, %v810, 0
        %v828 = vsel %vm263, %v811, 0
        %v831 = vsel %vm263, %v812, 0
        %v834 = vsel %vm263, %v813, 0
        %v837 = vsel %vm263, %v814, 0
        %839 = vmatprep.subr.mxu0 0.0
        %840 = vmatpush1.msra.mxu0 0.0
        %841 = vmatprep.subr.mxu0 0.0
        %842 = vmatpush1.msra.mxu0 0.0
        %843 = vmatprep.subr.mxu0 0.0
        %844 = vmatpush1.msra.mxu0 0.0
        %845 = vmatprep.subr.mxu0 0.0
        %846 = vmatpush1.msra.mxu0 0.0
        %847 = vmatprep.subr.mxu0 0.0
        %848 = vmatpush1.msra.mxu0 0.0
        %849 = vmatprep.subr.mxu0 0.0
        %850 = vmatpush1.msra.mxu0 0.0
        %851 = vmatprep.subr.mxu0 0.0
        %852 = vmatpush1.msra.mxu0 0.0
        %853 = vmatprep.subr.mxu0 0.0
        %854 = vmatpush1.msra.mxu0 0.0
        %855 = vmatprep.subr.mxu0 0.0
        %856 = vmatpush1.msra.mxu0 0.0
        %857 = vmatprep.subr.mxu0 0.0
        %858 = vmatpush1.msra.mxu0 0.0
        %859 = vmatprep.subr.mxu0 0.0
        %860 = vmatpush1.msra.mxu0 0.0
        %861 = vmatprep.subr.mxu0 0.0
        %862 = vmatpush1.msra.mxu0 0.0
        %863 = vmatprep.subr.mxu0 0.0
        %864 = vmatpush1.msra.mxu0 0.0
        %865 = vmatprep.subr.mxu0 0.0
        %866 = vmatpush1.msra.mxu0 0.0
        %867 = vmatprep.subr.mxu0 0.0
        %868 = vmatpush1.msra.mxu0 %v532
        %869 = vmatprep.subr.mxu0 0.0
        %870 = vmatpush1.msra.mxu0 %v531
        %871 = vmatprep.subr.mxu0 0.0
        %872 = vmatpush2.msra.mxu0 0.0
        %873 = vmatprep.subr.mxu0 0.0
        %874 = vmatpush2.msra.mxu0 0.0
        %875 = vmatprep.subr.mxu0 0.0
        %876 = vmatpush2.msra.mxu0 0.0
        %877 = vmatprep.subr.mxu0 0.0
        %878 = vmatpush2.msra.mxu0 0.0
        %879 = vmatprep.subr.mxu0 0.0
        %880 = vmatpush2.msra.mxu0 0.0
        %881 = vmatprep.subr.mxu0 0.0
        %882 = vmatpush2.msra.mxu0 0.0
        %883 = vmatprep.subr.mxu0 0.0
        %884 = vmatpush2.msra.mxu0 0.0
        %885 = vmatprep.subr.mxu0 0.0
        %886 = vmatpush2.msra.mxu0 0.0
        %887 = vmatprep.subr.mxu0 0.0
        %888 = vmatpush2.msra.mxu0 0.0
        %889 = vmatprep.subr.mxu0 0.0
        %890 = vmatpush2.msra.mxu0 0.0
        %891 = vmatprep.subr.mxu0 0.0
        %892 = vmatpush2.msra.mxu0 0.0
        %893 = vmatprep.subr.mxu0 0.0
        %894 = vmatpush2.msra.mxu0 0.0
        %895 = vmatprep.subr.mxu0 0.0
        %896 = vmatpush2.msra.mxu0 0.0
        %897 = vmatprep.subr.mxu0 0.0
        %898 = vmatpush2.msra.mxu0 0.0
        %899 = vmatprep.subr.mxu0 0.0
        %900 = vmatpush2.msra.mxu0 0.0
        %901 = vmatprep.subr.mxu0 0.0
        %902 = vmatpush2.msra.mxu0 0.0
        %903 = vmatprep.mubr.f32.mxu0 0.0
        %904 = vmatmul.mubr.f32.gmra.mxu0 %v816
        %v905 = vpop.f32.mrf.mxu0
        %v906 = vadd.f32 0.0, %v905
        %v907 = vpop.f32.mrf.mxu0
        %908 = vmatprep.mubr.f32.mxu0 0.0
        %909 = vmatmul.mubr.f32.gmra.mxu0 %v819
        %v910 = vpop.f32.mrf.mxu0
        %v911 = vadd.f32 0.0, %v910
        %v912 = vpop.f32.mrf.mxu0
        %913 = vmatprep.mubr.f32.mxu0 0.0
        %914 = vmatmul.mubr.f32.gmra.mxu0 %v822
        %v915 = vpop.f32.mrf.mxu0
        %v916 = vadd.f32 0.0, %v915
        %v917 = vpop.f32.mrf.mxu0
        %918 = vmatprep.mubr.f32.mxu0 0.0
        %919 = vmatmul.mubr.f32.gmra.mxu0 %v825
        %v920 = vpop.f32.mrf.mxu0
        %v921 = vadd.f32 0.0, %v920
        %v922 = vpop.f32.mrf.mxu0
        %923 = vmatprep.mubr.f32.mxu0 0.0
        %924 = vmatmul.mubr.f32.gmra.mxu0 %v828
        %v925 = vpop.f32.mrf.mxu0
        %v926 = vadd.f32 0.0, %v925
        %v927 = vpop.f32.mrf.mxu0
        %928 = vmatprep.mubr.f32.mxu0 0.0
        %929 = vmatmul.mubr.f32.gmra.mxu0 %v831
        %v930 = vpop.f32.mrf.mxu0
        %v931 = vadd.f32 0.0, %v930
        %v932 = vpop.f32.mrf.mxu0
        %933 = vmatprep.mubr.f32.mxu0 0.0
        %934 = vmatmul.mubr.f32.gmra.mxu0 %v834
        %v935 = vpop.f32.mrf.mxu0
        %v936 = vadd.f32 0.0, %v935
        %v937 = vpop.f32.mrf.mxu0
        %938 = vmatprep.mubr.f32.mxu0 0.0
        %939 = vmatmul.mubr.f32.gmra.mxu0 %v837
        %v940 = vpop.f32.mrf.mxu0
        %v941 = vadd.f32 0.0, %v940
        %v942 = vpop.f32.mrf.mxu0
        %943 = vdwg.mxu0
        %v944 = vmul.f32 %v662, %v906
        %v945 = vmul.f32 %v663, %v911
        %v946 = vmul.f32 %v664, %v916
        %v947 = vmul.f32 %v665, %v921
        %v948 = vmul.f32 %v666, %v926
        %v949 = vmul.f32 %v667, %v931
        %v950 = vmul.f32 %v668, %v936
        %v951 = vmul.f32 %v669, %v941
        %v952 = vld [vmem:[%s4] sm:$0x1]
        %v954 = vlaneseq
        %v955 = vshrl.u32 %v954, 7
        %v956 = vsub.s32 0, %v955
        %v957 = vrot.slane %v952, %v956
        %v959 = vmul.f32 %v944, %v957
        %v960 = vmul.f32 %v945, %v957
        %v961 = vmul.f32 %v946, %v957
        %v962 = vmul.f32 %v947, %v957
        %v963 = vmul.f32 %v948, %v957
        %v964 = vmul.f32 %v949, %v957
        %v965 = vmul.f32 %v950, %v957
        %v966 = vmul.f32 %v951, %v957
        %v967 = vld [vmem:[%s5] sm:$0x1]
        %v969 = vlaneseq
        %v970 = vshrl.u32 %v969, 7
        %v971 = vsub.s32 0, %v970
        %v972 = vrot.slane %v967, %v971
        %v974 = vadd.f32 %v959, %v972
        %v975 = vadd.f32 %v960, %v972
        %v976 = vadd.f32 %v961, %v972
        %v977 = vadd.f32 %v962, %v972
        %v978 = vadd.f32 %v963, %v972
        %v979 = vadd.f32 %v964, %v972
        %v980 = vadd.f32 %v965, %v972
        %v981 = vadd.f32 %v966, %v972
        %982 = vst.msk [vmem:[%s245] sm:$0xff] %vm263, %v974
        %983 = vst.msk [vmem:[%s245 + $0x20] sm:$0xff] %vm263, %v975
        %984 = vst.msk [vmem:[%s245 + $0x40] sm:$0xff] %vm263, %v976
        %985 = vst.msk [vmem:[%s245 + $0x60] sm:$0xff] %vm263, %v977
        %986 = vst.msk [vmem:[%s245 + $0x80] sm:$0xff] %vm263, %v978
        %987 = vst.msk [vmem:[%s245 + $0xa0] sm:$0xff] %vm263, %v979
        %988 = vst.msk [vmem:[%s245 + $0xc0] sm:$0xff] %vm263, %v980
        %989 = vst.msk [vmem:[%s245 + $0xe0] sm:$0xff] %vm263, %v981
        %998 = vrot.lane.b32.xlu0 %v974, 112
        %v999 = vpop.permute.xlu0 %998
        %1000 = vrot.lane.b32.xlu0 %v975, 112
        %v1001 = vpop.permute.xlu0 %1000
        %1002 = vrot.lane.b32.xlu0 %v976, 112
        %v1003 = vpop.permute.xlu0 %1002
        %1004 = vrot.lane.b32.xlu0 %v977, 112
        %v1005 = vpop.permute.xlu0 %1004
        %1006 = vrot.lane.b32.xlu0 %v978, 112
        %v1007 = vpop.permute.xlu0 %1006
        %1008 = vrot.lane.b32.xlu0 %v979, 112
        %v1009 = vpop.permute.xlu0 %1008
        %1010 = vrot.lane.b32.xlu0 %v980, 112
        %v1011 = vpop.permute.xlu0 %1010
        %1012 = vrot.lane.b32.xlu0 %v981, 112
        %v1013 = vpop.permute.xlu0 %1012
        %s1022 = scalar_lea.vmem %s245, 8 [#allocation2]
        %1023 = vst.msk [vmem:[%s1022] sm:$0xff] %vm263, %v999
        %1024 = vst.msk [vmem:[%s1022 + $0x20] sm:$0xff] %vm263, %v1001
        %1025 = vst.msk [vmem:[%s1022 + $0x40] sm:$0xff] %vm263, %v1003
        %1026 = vst.msk [vmem:[%s1022 + $0x60] sm:$0xff] %vm263, %v1005
        %1027 = vst.msk [vmem:[%s1022 + $0x80] sm:$0xff] %vm263, %v1007
        %1028 = vst.msk [vmem:[%s1022 + $0xa0] sm:$0xff] %vm263, %v1009
        %1029 = vst.msk [vmem:[%s1022 + $0xc0] sm:$0xff] %vm263, %v1011
        %1030 = vst.msk [vmem:[%s1022 + $0xe0] sm:$0xff] %vm263, %v1013
        %1031 = vrot.lane.b32.xlu0 %v974, 96
        %v1032 = vpop.permute.xlu0 %1031
        %1033 = vrot.lane.b32.xlu0 %v975, 96
        %v1034 = vpop.permute.xlu0 %1033
        %1035 = vrot.lane.b32.xlu0 %v976, 96
        %v1036 = vpop.permute.xlu0 %1035
        %1037 = vrot.lane.b32.xlu0 %v977, 96
        %v1038 = vpop.permute.xlu0 %1037
        %1039 = vrot.lane.b32.xlu0 %v978, 96
        %v1040 = vpop.permute.xlu0 %1039
        %1041 = vrot.lane.b32.xlu0 %v979, 96
        %v1042 = vpop.permute.xlu0 %1041
        %1043 = vrot.lane.b32.xlu0 %v980, 96
        %v1044 = vpop.permute.xlu0 %1043
        %1045 = vrot.lane.b32.xlu0 %v981, 96
        %v1046 = vpop.permute.xlu0 %1045
        %s1055 = scalar_lea.vmem %s245, 16 [#allocation2]
        %1056 = vst.msk [vmem:[%s1055] sm:$0xff] %vm263, %v1032
        %1057 = vst.msk [vmem:[%s1055 + $0x20] sm:$0xff] %vm263, %v1034
        %1058 = vst.msk [vmem:[%s1055 + $0x40] sm:$0xff] %vm263, %v1036
        %1059 = vst.msk [vmem:[%s1055 + $0x60] sm:$0xff] %vm263, %v1038
        %1060 = vst.msk [vmem:[%s1055 + $0x80] sm:$0xff] %vm263, %v1040
        %1061 = vst.msk [vmem:[%s1055 + $0xa0] sm:$0xff] %vm263, %v1042
        %1062 = vst.msk [vmem:[%s1055 + $0xc0] sm:$0xff] %vm263, %v1044
        %1063 = vst.msk [vmem:[%s1055 + $0xe0] sm:$0xff] %vm263, %v1046
        %1064 = vrot.lane.b32.xlu0 %v974, 80
        %v1065 = vpop.permute.xlu0 %1064
        %1066 = vrot.lane.b32.xlu0 %v975, 80
        %v1067 = vpop.permute.xlu0 %1066
        %1068 = vrot.lane.b32.xlu0 %v976, 80
        %v1069 = vpop.permute.xlu0 %1068
        %1070 = vrot.lane.b32.xlu0 %v977, 80
        %v1071 = vpop.permute.xlu0 %1070
        %1072 = vrot.lane.b32.xlu0 %v978, 80
        %v1073 = vpop.permute.xlu0 %1072
        %1074 = vrot.lane.b32.xlu0 %v979, 80
        %v1075 = vpop.permute.xlu0 %1074
        %1076 = vrot.lane.b32.xlu0 %v980, 80
        %v1077 = vpop.permute.xlu0 %1076
        %1078 = vrot.lane.b32.xlu0 %v981, 80
        %v1079 = vpop.permute.xlu0 %1078
        %s1088 = scalar_lea.vmem %s245, 24 [#allocation2]
        %1089 = vst.msk [vmem:[%s1088] sm:$0xff] %vm263, %v1065
        %1090 = vst.msk [vmem:[%s1088 + $0x20] sm:$0xff] %vm263, %v1067
        %1091 = vst.msk [vmem:[%s1088 + $0x40] sm:$0xff] %vm263, %v1069
        %1092 = vst.msk [vmem:[%s1088 + $0x60] sm:$0xff] %vm263, %v1071
        %1093 = vst.msk [vmem:[%s1088 + $0x80] sm:$0xff] %vm263, %v1073
        %1094 = vst.msk [vmem:[%s1088 + $0xa0] sm:$0xff] %vm263, %v1075
        %1095 = vst.msk [vmem:[%s1088 + $0xc0] sm:$0xff] %vm263, %v1077
        %1096 = vst.msk [vmem:[%s1088 + $0xe0] sm:$0xff] %vm263, %v1079
        %s1097 = sand.u32 %s159, 1
        %s1098 = scalar_lea.sflag [#allocation3], %s1097
        %s1099 = sand.u32 %s159, 1
        %s1100 = smul.addr %s1099, 256
        %s1101 = scalar_lea.vmem [#allocation2], %s1100
        // Predicated region
        $region45: #{tpu_custom_call.1} parent=43 // pred_check
          %p1102 = pneg %p169
        $region46: #{tpu_custom_call.1} parent=43 // pred_check_branch
          %1104 = sbr.rel (%p1102) target = $region48
        $region47: #{tpu_custom_call.1} parent=43 // pred_region
          %s1105 = smul.u32 8, %s20
          %s1107 = ssub.s32 4096, 4096
          %1108 = vsyncadd %s1098, %s1107
          %s1109 = smul.addr %s1105, 4
          %s1110 = smul.addr %s1109, 128
          %s1111 = scalar_lea.hbm %s6, %s1110
          %s1112 = sshll.u32 %s1101, 4
          %s1113 = int_to_ptr.vmem [resolvable:$true] %s1112
          %1118 = dma.vmem_to_hbm [thread:$0]  %s1113, 4096, %s1111, %s1098, 128, 128, 8
        $region48: #{tpu_custom_call.1} parent=43 // pred_fallthru
          _
      $region44: #{tpu_custom_call.1} parent=5 // pred_fallthru
        _
      %p1119 = scmp.le.s32.totalorder 2, %s15
      // Predicated region
      $region49: #{tpu_custom_call.1} parent=5 // pred_check
        %p1120 = pneg %p1119
      $region50: #{tpu_custom_call.1} parent=5 // pred_check_branch
        %1122 = sbr.rel (%p1120) target = $region52
      $region51: #{tpu_custom_call.1} parent=5 // pred_region
        %s1123 = ssub.s32 %s15, 2
        // Predicated region
        $region53: #{tpu_custom_call.1} parent=51 // pred_check
          %p1124 = pneg %p175
        $region54: #{tpu_custom_call.1} parent=51 // pred_check_branch
          %1126 = sbr.rel (%p1124) target = $region56
        $region55: #{tpu_custom_call.1} parent=51 // pred_region
          %s1127 = sand.u32 %s160, 1
          %s1128 = scalar_lea.sflag [#allocation3], %s1127
          %s1129 = sand.u32 %s160, 1
          %s1130 = smul.addr %s1129, 256
          %s1131 = scalar_lea.vmem [#allocation2], %s1130
          %1132 = dma.done %s1128, 4096
        $region56: #{tpu_custom_call.1} parent=51 // pred_fallthru
          _
      $region52: #{tpu_custom_call.1} parent=5 // pred_fallthru
        _
    $region6: #{tpu_custom_call.1} parent=1 // loop_footer
      %s19 = sadd.s32 1, %s15
    $region7: #{tpu_custom_call.1} parent=1 // loop_footer_branch
      %14 = sbr.rel target = $region3
    $region8: #{tpu_custom_call.1} parent=1 // loop_exit
      _
    %1133 = vsyncpa [#allocation3], 1
    %s1134 = scalar_lea.sflag [#allocation3], 1
    %1135 = vsyncpa %s1134, 1

</llo_original>
